<compile_context>
chip_gen: v5e
topology: v5e:2x2
jax: 0.10.0
libtpu: 0.0.40
codegen_flags: <defaults>
</compile_context>

<pallas_src>
import functools
import math

import jax
import jax.numpy as jnp
from jax.experimental import pallas as pl
from jax.experimental.pallas import tpu as pltpu


N_OUT = 128  # lane-dense fused width (repr | reward | mixture | ... | z)


# ---------------------------------------------------------------------------
# Fused Pallas kernel
# ---------------------------------------------------------------------------
def world_model_kernel(x_ref, w1_ref, b1_ref, wf_ref, bf_ref,
                       invvar_ref, crest_ref, out_ref, *, L, K, z_off):
    # --- encoder layer 1 : bf16 MXU, f32 accumulation -----------------------
    h = jnp.dot(x_ref[...], w1_ref[...],
                preferred_element_type=jnp.float32) + b1_ref[...]      # (TB, Hd)
    h = jnp.maximum(h, 0.0).astype(jnp.bfloat16)

    # --- single fused (TB,Hd)@(Hd,128) matmul -------------------------------
    # lanes [0,L)        : z @ wr   + bias   (repr pre-activation)
    # lane  L            : z @ wrew + bias   (reward)
    # lanes [L+1,L+1+K)  : z @ (mu^T*inv_var) + b2-term - 0.5*||mu||^2*inv_var
    # lanes [z_off,z_off+L): z = h @ w2 + b2  (latent, for ||z||^2)
    fused = jnp.dot(h, wf_ref[...],
                    preferred_element_type=jnp.float32) + bf_ref[...]  # (TB,128)

    z = fused[:, z_off:z_off + L]                                      # (TB, L)
    zmu = fused[:, L + 1:L + 1 + K]                                    # (TB, K)

    # --- cspn.forward : Gaussian-mixture log-likelihood (f32 VPU/EUP) ------
    z_sq = jnp.sum(z * z, axis=-1, keepdims=True)                      # (TB, 1)
    # quad == -0.5 * ||z - mu_k||^2 * inv_var_k  (expanded-square form)
    quad = zmu - 0.5 * z_sq * invvar_ref[...]                          # (TB, K)
    quad = jnp.minimum(quad, 0.0)            # clamp cancellation (dist2 >= 0)
    log_comp = quad + crest_ref[...]                                   # (TB, K)
    m = jnp.max(log_comp, axis=-1, keepdims=True)                      # (TB, 1)
    prob = m + jnp.log(jnp.sum(jnp.exp(log_comp - m),
                               axis=-1, keepdims=True))                # (TB, 1)

    # --- assemble the packed tile in registers, ONE full-width store -------
    tb, n_out = out_ref.shape
    lane = jax.lax.broadcasted_iota(jnp.int32, (tb, n_out), 1)
    relu_fused = jnp.maximum(fused, 0.0)                    # ReLU (used <L)
    prob_b = jnp.broadcast_to(prob, (tb, n_out))
    out_block = jnp.where(lane < L, relu_fused,             # repr
                jnp.where(lane == L, fused,                 # reward (no ReLU)
                jnp.where(lane == L + 1, prob_b,            # log-prob
                          0.0)))                            # zero padding
    out_ref[...] = out_block


# ---------------------------------------------------------------------------
# One-time parameter preparation (compose w2 into the post-hidden RHS, fold
# biases/constants, cast matmul operands to bf16).  Do once, reuse.
# ---------------------------------------------------------------------------
def prepare_params(p):
    Hd = p["w1"].shape[1]
    L = p["w2"].shape[1]
    K = p["mu"].shape[0]
    z_off = N_OUT - L                    # z lanes live at the aligned tail
    assert L + 1 + K <= z_off <= N_OUT - L

    inv_var = jnp.exp(-2.0 * p["logsig"])                              # (1, K)
    mu_sq = jnp.sum(p["mu"] * p["mu"], axis=-1)[None, :]               # (1, K)
    neg_half_musq = -0.5 * mu_sq * inv_var                             # (1, K)
    const_rest = (-L * p["logsig"]
                  - 0.5 * L * math.log(2.0 * math.pi)
                  + p["logw"])                                         # (1, K)

    w_mu = p["mu"].T * inv_var                                         # (L, K)

    # Compose w2 with every post-latent matmul (f32 compose, then bf16 cast):
    #   fused RHS = [w2@wr | w2@wrew | w2@(mu^T*inv_var) | 0 ... | w2]
    w_fused = jnp.zeros((Hd, N_OUT), jnp.float32)
    w_fused = w_fused.at[:, :L].set(p["w2"] @ p["wr"])
    w_fused = w_fused.at[:, L:L + 1].set(p["w2"] @ p["wrew"])
    w_fused = w_fused.at[:, L + 1:L + 1 + K].set(p["w2"] @ w_mu)
    w_fused = w_fused.at[:, z_off:z_off + L].set(p["w2"])

    # Matching f32 bias with b2 pushed through, plus -0.5*||mu||^2*inv_var
    # folded into the mixture lanes (added in f32, precision unchanged).
    b_fused = jnp.zeros((1, N_OUT), jnp.float32)
    b_fused = b_fused.at[:, :L].set(p["b2"] @ p["wr"] + p["br"])
    b_fused = b_fused.at[:, L:L + 1].set(p["b2"] @ p["wrew"] + p["brew"])
    b_fused = b_fused.at[:, L + 1:L + 1 + K].set(p["b2"] @ w_mu + neg_half_musq)
    b_fused = b_fused.at[:, z_off:z_off + L].set(p["b2"])

    return {
        "L": L, "K": K, "z_off": z_off,
        "w1": p["w1"].astype(jnp.bfloat16),
        "b1": p["b1"].astype(jnp.float32),
        "w_fused": w_fused.astype(jnp.bfloat16),
        "b_fused": b_fused,
        "inv_var": inv_var,
        "const_rest": const_rest,
    }


# ---------------------------------------------------------------------------
# Wrapper
# ---------------------------------------------------------------------------
def _round_up(n, m):
    return ((n + m - 1) // m) * m


def world_model_forward(x_nchw, prep):
    B = x_nchw.shape[0]
    # bf16 input in the wrapper: halves the dominant HBM stream and the
    # double-buffered x-tile VMEM footprint; no in-kernel VPU cast.
    x_flat = x_nchw.reshape(B, -1).astype(jnp.bfloat16)                # (B, D)
    D = x_flat.shape[1]
    L, K, z_off = prep["L"], prep["K"], prep["z_off"]

    # Batch tile: multiple of 16 (bf16 sublane packing), capped at 512 for
    # DMA efficiency; when the batch allows, use >=2 grid steps so the
    # "parallel" axis can shard across both TensorCores on v7x.
    B16 = _round_up(B, 16)
    if B16 >= 2 * 512:
        TB = 512
    elif B16 >= 32:
        TB = _round_up((B16 + 1) // 2, 16)
    else:
        TB = B16
    B_pad = _round_up(B16, TB)
    if B_pad != B:
        x_flat = jnp.pad(x_flat, ((0, B_pad - B), (0, 0)))

    grid = (B_pad // TB,)

    def const_spec(arr):
        # full-array block, constant block index -> stays resident across the
        # batch grid (no re-DMA between steps).
        # TODO(synk): on v7x at much larger D/Hd, add a contraction grid axis
        # for w1 with an f32 accumulator scratch (64 MiB VMEM ceiling) and
        # consider pipeline_mode=pl.Buffered(1) on these constant specs.
        return pl.BlockSpec(arr.shape, lambda i: (0, 0))

    kernel = functools.partial(world_model_kernel, L=L, K=K, z_off=z_off)

    in_specs = [
        pl.BlockSpec((TB, D), lambda i: (i, 0)),      # x (batch-tiled, bf16)
        const_spec(prep["w1"]),
        const_spec(prep["b1"]),
        const_spec(prep["w_fused"]),
        const_spec(prep["b_fused"]),
        const_spec(prep["inv_var"]),
        const_spec(prep["const_rest"]),
    ]
    out_spec = pl.BlockSpec((TB, N_OUT), lambda i: (i, 0))

    packed = pl.pallas_call(
        kernel,
        grid=grid,
        in_specs=in_specs,
        out_specs=out_spec,
        out_shape=jax.ShapeDtypeStruct((B_pad, N_OUT), jnp.float32),
        compiler_params=pltpu.CompilerParams(
            dimension_semantics=("parallel",)),       # megacore on v7x
    )(x_flat, prep["w1"], prep["b1"], prep["w_fused"], prep["b_fused"],
      prep["inv_var"], prep["const_rest"])

    # slice padded rows out and un-pack the lane-dense output
    repr_ = packed[:B, :L]
    reward = packed[:B, L]
    prob = packed[:B, L + 1]
    return repr_, reward, prob


# ---------------------------------------------------------------------------
# Deterministic parameter construction (synthetic, no checkpoint loading)
# ---------------------------------------------------------------------------
def make_params(D, Hd, L, K, key):
    ks = jax.random.split(key, 8)
    scale1 = 1.0 / math.sqrt(D)
    scale2 = 1.0 / math.sqrt(Hd)
    scale3 = 1.0 / math.sqrt(L)
    logw = jax.random.normal(ks[6], (1, K), jnp.float32)
    logw = logw - jax.nn.logsumexp(logw, axis=-1, keepdims=True)      # normalized
    return {
        "w1":     jax.random.normal(ks[0], (D, Hd), jnp.float32) * scale1,
        "b1":     jnp.zeros((1, Hd), jnp.float32),
        "w2":     jax.random.normal(ks[1], (Hd, L), jnp.float32) * scale2,
        "b2":     jnp.zeros((1, L), jnp.float32),
        "wr":     jax.random.normal(ks[2], (L, L), jnp.float32) * scale3,
        "br":     jnp.zeros((1, L), jnp.float32),
        "wrew":   jax.random.normal(ks[3], (L, 1), jnp.float32) * scale3,
        "brew":   jnp.zeros((1, 1), jnp.float32),
        "mu":     jax.random.normal(ks[4], (K, L), jnp.float32),
        "logsig": 0.1 * jax.random.normal(ks[5], (1, K), jnp.float32),
        "logw":   logw,
    }


# ---------------------------------------------------------------------------
# Pure-JAX f32 reference (same math) for a correctness sanity check
# ---------------------------------------------------------------------------
def reference_forward(x_nchw, p):
    B = x_nchw.shape[0]
    x = x_nchw.reshape(B, -1).astype(jnp.float32)
    h = jnp.maximum(x @ p["w1"] + p["b1"], 0.0)
    z = h @ p["w2"] + p["b2"]
    repr_ = jnp.maximum(z @ p["wr"] + p["br"], 0.0)
    reward = (z @ p["wrew"] + p["brew"])[:, 0]
    L = z.shape[-1]
    diff = z[:, None, :] - p["mu"][None, :, :]
    dist2 = jnp.sum(diff * diff, axis=-1)
    log_comp = (-0.5 * dist2 * jnp.exp(-2.0 * p["logsig"])
                - L * p["logsig"]
                - 0.5 * L * math.log(2.0 * math.pi)
                + p["logw"])
    prob = jax.nn.logsumexp(log_comp, axis=-1)
    return repr_, reward, prob


if __name__ == "__main__":
    # Small shapes consistent with the module: NCHW images, latent_dim=32.
    B, C, H, W = 2, 4, 16, 16
    D = C * H * W
    Hd = 128          # encoder hidden width
    L = 32            # latent_dim
    K = 8             # CSPN mixture components

    key_x, key_p = jax.random.split(jax.random.PRNGKey(0))
    x = jax.random.normal(key_x, (B, C, H, W), jnp.float32)
    params = make_params(D, Hd, L, K, key_p)
    prep = prepare_params(params)     # one-time: composition + bf16 casts

    repr_, reward, prob = world_model_forward(x, prep)
    jax.block_until_ready((repr_, reward, prob))

    # sanity check against the pure-JAX f32 reference (bf16 MXU -> loose tol)
    r_ref, rew_ref, p_ref = reference_forward(x, params)
    assert repr_.shape == (B, L) and reward.shape == (B,) and prob.shape == (B,)
    assert jnp.allclose(repr_, r_ref, atol=5e-2, rtol=3e-2)
    assert jnp.allclose(reward, rew_ref, atol=5e-2, rtol=3e-2)
    assert jnp.allclose(prob, p_ref, atol=5e-2, rtol=3e-2)

    # TODO(synk): the PyTorch module's submodules (encoder/decoder/cspn) are
    # injected at construction time; concrete synthetic architectures are
    # defined above since no reference architecture is available.
    # TODO(synk): if `prob` precision on ill-conditioned inputs matters,
    # compute the z@(mu^T*inv_var) term in f32 inside the kernel instead of
    # through the composed bf16 RHS (tiny matmul; the quad<=0 clamp only fixes
    # the sign of the cancellation, not its magnitude).

    print("KERNEL_OK")
</pallas_src>

<mosaic_0001>
module attributes {stable_mosaic.version = 11 : i64} {
  func.func @world_model_kernel(%arg0: i32, %arg1: memref<16x1024xbf16, #tpu.memory_space<vmem>>, %arg2: memref<1024x128xbf16, #tpu.memory_space<vmem>>, %arg3: memref<1x128xf32, #tpu.memory_space<vmem>>, %arg4: memref<128x128xbf16, #tpu.memory_space<vmem>>, %arg5: memref<1x128xf32, #tpu.memory_space<vmem>>, %arg6: memref<1x8xf32, #tpu.memory_space<vmem>>, %arg7: memref<1x8xf32, #tpu.memory_space<vmem>>, %arg8: memref<16x128xf32, #tpu.memory_space<vmem>>) attributes {dimension_semantics = [#tpu.dimension_semantics<parallel>], iteration_bounds = array<i64: 1>, scalar_prefetch = 0 : i64, scratch_operands = 0 : i64, tpu.core_type = #tpu.core_type<tc>, window_params = [{transform_indices = @transform_0, window_bounds = array<i64: 16, 1024>}, {pipeline_mode = #tpu.pipeline_mode<synchronous>, transform_indices = @transform_1, window_bounds = array<i64: 1024, 128>}, {pipeline_mode = #tpu.pipeline_mode<synchronous>, transform_indices = @transform_2, window_bounds = array<i64: 1, 128>}, {pipeline_mode = #tpu.pipeline_mode<synchronous>, transform_indices = @transform_3, window_bounds = array<i64: 128, 128>}, {pipeline_mode = #tpu.pipeline_mode<synchronous>, transform_indices = @transform_4, window_bounds = array<i64: 1, 128>}, {pipeline_mode = #tpu.pipeline_mode<synchronous>, transform_indices = @transform_5, window_bounds = array<i64: 1, 8>}, {pipeline_mode = #tpu.pipeline_mode<synchronous>, transform_indices = @transform_6, window_bounds = array<i64: 1, 8>}, {transform_indices = @transform_7, window_bounds = array<i64: 16, 128>}]} {
    %c0 = arith.constant 0 : index
    %c0_0 = arith.constant 0 : index
    %0 = vector.load %arg1[%c0, %c0_0] : memref<16x1024xbf16, #tpu.memory_space<vmem>>, vector<16x1024xbf16>
    %c0_1 = arith.constant 0 : index
    %c0_2 = arith.constant 0 : index
    %1 = vector.load %arg2[%c0_1, %c0_2] : memref<1024x128xbf16, #tpu.memory_space<vmem>>, vector<1024x128xbf16>
    %cst = arith.constant dense<0.000000e+00> : vector<16x128xf32>
    %2 = tpu.matmul %0, %1, %cst {dimension_numbers = #tpu.dot_dimension_numbers<[1], [0], [0], [1], [0, 0, 1, 1], [], []>} : vector<16x1024xbf16>, vector<1024x128xbf16>, vector<16x128xf32> -> vector<16x128xf32>
    %c0_3 = arith.constant 0 : index
    %c0_4 = arith.constant 0 : index
    %3 = vector.load %arg3[%c0_3, %c0_4] : memref<1x128xf32, #tpu.memory_space<vmem>>, vector<1x128xf32>
    %4 = vector.broadcast %3 : vector<1x128xf32> to vector<16x128xf32>
    %5 = arith.addf %2, %4 : vector<16x128xf32>
    %cst_5 = arith.constant 0.000000e+00 : f32
    %6 = vector.broadcast %cst_5 : f32 to vector<16x128xf32>
    %7 = arith.maximumf %5, %6 : vector<16x128xf32>
    %8 = arith.truncf %7 : vector<16x128xf32> to vector<16x128xbf16>
    %c0_6 = arith.constant 0 : index
    %c0_7 = arith.constant 0 : index
    %9 = vector.load %arg4[%c0_6, %c0_7] : memref<128x128xbf16, #tpu.memory_space<vmem>>, vector<128x128xbf16>
    %cst_8 = arith.constant dense<0.000000e+00> : vector<16x128xf32>
    %10 = tpu.matmul %8, %9, %cst_8 {dimension_numbers = #tpu.dot_dimension_numbers<[1], [0], [0], [1], [0, 0, 1, 1], [], []>} : vector<16x128xbf16>, vector<128x128xbf16>, vector<16x128xf32> -> vector<16x128xf32>
    %c0_9 = arith.constant 0 : index
    %c0_10 = arith.constant 0 : index
    %11 = vector.load %arg5[%c0_9, %c0_10] : memref<1x128xf32, #tpu.memory_space<vmem>>, vector<1x128xf32>
    %12 = vector.broadcast %11 : vector<1x128xf32> to vector<16x128xf32>
    %13 = arith.addf %10, %12 : vector<16x128xf32>
    %14 = vector.extract_strided_slice %13 {offsets = [0, 96], sizes = [16, 32], strides = [1, 1]} : vector<16x128xf32> to vector<16x32xf32>
    %15 = vector.extract_strided_slice %13 {offsets = [0, 33], sizes = [16, 8], strides = [1, 1]} : vector<16x128xf32> to vector<16x8xf32>
    %16 = arith.mulf %14, %14 : vector<16x32xf32>
    %cst_11 = arith.constant dense<0.000000e+00> : vector<16xf32>
    %17 = vector.multi_reduction <add>, %16, %cst_11 [1] : vector<16x32xf32> to vector<16xf32>
    %18 = vector.shape_cast %17 : vector<16xf32> to vector<16x1xf32>
    %cst_12 = arith.constant 5.000000e-01 : f32
    %19 = vector.broadcast %cst_12 : f32 to vector<16x1xf32>
    %20 = arith.mulf %19, %18 : vector<16x1xf32>
    %c0_13 = arith.constant 0 : index
    %c0_14 = arith.constant 0 : index
    %21 = vector.load %arg6[%c0_13, %c0_14] : memref<1x8xf32, #tpu.memory_space<vmem>>, vector<1x8xf32>
    %22 = vector.broadcast %20 : vector<16x1xf32> to vector<16x8xf32>
    %23 = vector.broadcast %21 : vector<1x8xf32> to vector<16x8xf32>
    %24 = arith.mulf %22, %23 : vector<16x8xf32>
    %25 = arith.subf %15, %24 : vector<16x8xf32>
    %cst_15 = arith.constant 0.000000e+00 : f32
    %26 = vector.broadcast %cst_15 : f32 to vector<16x8xf32>
    %27 = arith.minimumf %25, %26 : vector<16x8xf32>
    %c0_16 = arith.constant 0 : index
    %c0_17 = arith.constant 0 : index
    %28 = vector.load %arg7[%c0_16, %c0_17] : memref<1x8xf32, #tpu.memory_space<vmem>>, vector<1x8xf32>
    %29 = vector.broadcast %28 : vector<1x8xf32> to vector<16x8xf32>
    %30 = arith.addf %27, %29 : vector<16x8xf32>
    %cst_18 = arith.constant dense<0xFF800000> : vector<16xf32>
    %31 = vector.multi_reduction <maximumf>, %30, %cst_18 [1] : vector<16x8xf32> to vector<16xf32>
    %32 = vector.shape_cast %31 : vector<16xf32> to vector<16x1xf32>
    %33 = vector.broadcast %32 : vector<16x1xf32> to vector<16x8xf32>
    %34 = arith.subf %30, %33 : vector<16x8xf32>
    %35 = math.exp %34 : vector<16x8xf32>
    %cst_19 = arith.constant dense<0.000000e+00> : vector<16xf32>
    %36 = vector.multi_reduction <add>, %35, %cst_19 [1] : vector<16x8xf32> to vector<16xf32>
    %37 = vector.shape_cast %36 : vector<16xf32> to vector<16x1xf32>
    %38 = math.log %37 : vector<16x1xf32>
    %39 = arith.addf %32, %38 : vector<16x1xf32>
    %40 = tpu.iota {dimensions = array<i32: 1>} : vector<16x128xi32>
    %cst_20 = arith.constant 0.000000e+00 : f32
    %41 = vector.broadcast %cst_20 : f32 to vector<16x128xf32>
    %42 = arith.maximumf %13, %41 : vector<16x128xf32>
    %43 = vector.shape_cast %39 : vector<16x1xf32> to vector<16x1xf32>
    %44 = vector.broadcast %43 : vector<16x1xf32> to vector<16x128xf32>
    %c32_i32 = arith.constant 32 : i32
    %45 = vector.broadcast %c32_i32 : i32 to vector<16x128xi32>
    %46 = arith.cmpi slt, %40, %45 : vector<16x128xi32>
    %c32_i32_21 = arith.constant 32 : i32
    %47 = vector.broadcast %c32_i32_21 : i32 to vector<16x128xi32>
    %48 = arith.cmpi eq, %40, %47 : vector<16x128xi32>
    %c33_i32 = arith.constant 33 : i32
    %49 = vector.broadcast %c33_i32 : i32 to vector<16x128xi32>
    %50 = arith.cmpi eq, %40, %49 : vector<16x128xi32>
    %cst_22 = arith.constant 0.000000e+00 : f32
    %51 = vector.broadcast %cst_22 : f32 to vector<16x128xf32>
    %52 = arith.select %50, %44, %51 : vector<16x128xi1>, vector<16x128xf32>
    %53 = arith.select %48, %13, %52 : vector<16x128xi1>, vector<16x128xf32>
    %54 = arith.select %46, %42, %53 : vector<16x128xi1>, vector<16x128xf32>
    %c0_23 = arith.constant 0 : index
    %c0_24 = arith.constant 0 : index
    %55 = vector.load %arg8[%c0_23, %c0_24] : memref<16x128xf32, #tpu.memory_space<vmem>>, vector<16x128xf32>
    tpu.vector_store %arg8[%c0_23, %c0_24], %54 {strides = array<i32>} : memref<16x128xf32, #tpu.memory_space<vmem>>, vector<16x128xf32>,
    return
  }
  func.func @transform_0(%arg0: i32) -> (i32, i32) {
    %c0_i32 = arith.constant 0 : i32
    %c0_i32_0 = arith.constant 0 : i32
    return %arg0, %c0_i32 : i32, i32
  }
  func.func @transform_1(%arg0: i32) -> (i32, i32) {
    %c0_i32 = arith.constant 0 : i32
    %c0_i32_0 = arith.constant 0 : i32
    %c0_i32_1 = arith.constant 0 : i32
    return %c0_i32, %c0_i32_0 : i32, i32
  }
  func.func @transform_2(%arg0: i32) -> (i32, i32) {
    %c0_i32 = arith.constant 0 : i32
    %c0_i32_0 = arith.constant 0 : i32
    %c0_i32_1 = arith.constant 0 : i32
    return %c0_i32, %c0_i32_0 : i32, i32
  }
  func.func @transform_3(%arg0: i32) -> (i32, i32) {
    %c0_i32 = arith.constant 0 : i32
    %c0_i32_0 = arith.constant 0 : i32
    %c0_i32_1 = arith.constant 0 : i32
    return %c0_i32, %c0_i32_0 : i32, i32
  }
  func.func @transform_4(%arg0: i32) -> (i32, i32) {
    %c0_i32 = arith.constant 0 : i32
    %c0_i32_0 = arith.constant 0 : i32
    %c0_i32_1 = arith.constant 0 : i32
    return %c0_i32, %c0_i32_0 : i32, i32
  }
  func.func @transform_5(%arg0: i32) -> (i32, i32) {
    %c0_i32 = arith.constant 0 : i32
    %c0_i32_0 = arith.constant 0 : i32
    %c0_i32_1 = arith.constant 0 : i32
    return %c0_i32, %c0_i32_0 : i32, i32
  }
  func.func @transform_6(%arg0: i32) -> (i32, i32) {
    %c0_i32 = arith.constant 0 : i32
    %c0_i32_0 = arith.constant 0 : i32
    %c0_i32_1 = arith.constant 0 : i32
    return %c0_i32, %c0_i32_0 : i32, i32
  }
  func.func @transform_7(%arg0: i32) -> (i32, i32) {
    %c0_i32 = arith.constant 0 : i32
    %c0_i32_0 = arith.constant 0 : i32
    return %arg0, %c0_i32 : i32, i32
  }
}

</mosaic_0001>

<llo_original>
// kernel: tpu_custom_call.1
$region0: #{tpu_custom_call.1}
  #allocation0 [shape = 'u32[]', space=smem, size = 0x4, offset = 0x4, fixed_abs, tag = 'smem constant byte address 0x4 - core index']
  #allocation1 [shape = 'u32[72,128]{1,0:T(1,128)}', space=vmem, size = 0x9000, scoped, tag = 'internal scratch']
  %s0 = inlined_call_operand.hbm [shape: bf16[16,1024], index: 0, kind: input, shape index: {}]
  %s1 = inlined_call_operand.hbm [shape: bf16[1024,128], index: 1, kind: input, shape index: {}]
  %s2 = inlined_call_operand.vmem [shape: f32[1,128], index: 2, kind: input, shape index: {}]
  %s3 = inlined_call_operand.hbm [shape: bf16[128,128], index: 3, kind: input, shape index: {}]
  %s4 = inlined_call_operand.vmem [shape: f32[1,128], index: 4, kind: input, shape index: {}]
  %s5 = inlined_call_operand.vmem [shape: f32[1,8], index: 5, kind: input, shape index: {}]
  %s6 = inlined_call_operand.vmem [shape: f32[1,8], index: 6, kind: input, shape index: {}]
  %s7 = inlined_call_operand.hbm [shape: f32[16,128], index: 7, kind: output, shape index: {}]
  %s8 = sld [smem:[#allocation0]]
  $region50: #{tpu_custom_call.1} parent=0
    _
  %s10 = ssub.s32 1, %s8
  %s11 = scalar_select 0, %s10, %s8
  $region1: #{tpu_custom_call.1} parent=0
    #allocation2 [shape = 'u8[32768]{0}', space=vmem, size = 0x8000, scoped, tag = 'input window, operand 0, single buffered']
    #allocation3 [shape = 's32[1]{0}', space=sflag, size = 0x4, scoped, tag = 'scoped memory for tpu_custom_call.1']
    #allocation4 [shape = 's32[1]{0}', space=sflag, size = 0x4, scoped, tag = 'scoped memory for tpu_custom_call.1']
    #allocation5 [shape = 'u8[262144]{0}', space=vmem, size = 0x40000, scoped, tag = 'input window, operand 1, single buffered']
    #allocation6 [shape = 's32[1]{0}', space=sflag, size = 0x4, scoped, tag = 'scoped memory for tpu_custom_call.1']
    #allocation7 [shape = 'u8[32768]{0}', space=vmem, size = 0x8000, scoped, tag = 'input window, operand 3, single buffered']
    #allocation8 [shape = 'u8[8192]{0}', space=vmem, size = 0x2000, scoped, tag = 'output window, operand 0, single buffered']
    %12 = vsyncpa [#allocation3], 0
    %13 = vsyncpa [#allocation6], 0
    %14 = vsyncpa [#allocation4], 0
    // Predicated region
    $region2: #{tpu_custom_call.1} parent=1 // pred_check
      _
    $region3: #{tpu_custom_call.1} parent=1 // pred_check_branch
      %16 = sbr.rel (0) target = $region5
    $region4: #{tpu_custom_call.1} parent=1 // pred_region
      %18 = vsyncadd [#allocation3], 0
      %s19 = sshll.u32 %s0, 4
      %s20 = int_to_ptr.hbm [resolvable:$true] %s19
      %s21 = sshll.u32 [#allocation2], 4
      %s22 = int_to_ptr.vmem [resolvable:$true] %s21
      %27 = dma.hbm_to_vmem [thread:$0]  %s20, 1024, %s22, [#allocation3], 512, 512, 32
    $region5: #{tpu_custom_call.1} parent=1 // pred_fallthru
      _
    // Predicated region
    $region6: #{tpu_custom_call.1} parent=1 // pred_check
      _
    $region7: #{tpu_custom_call.1} parent=1 // pred_check_branch
      %29 = sbr.rel (0) target = $region9
    $region8: #{tpu_custom_call.1} parent=1 // pred_region
      %31 = vsyncadd [#allocation6], 0
      %s32 = sshll.u32 %s1, 4
      %s33 = int_to_ptr.hbm [resolvable:$true] %s32
      %s34 = sshll.u32 [#allocation5], 4
      %s35 = int_to_ptr.vmem [resolvable:$true] %s34
      %40 = dma.hbm_to_vmem [thread:$0]  %s33, 8192, %s35, [#allocation6], 64, 64, 4
    $region9: #{tpu_custom_call.1} parent=1 // pred_fallthru
      _
    // Predicated region
    $region10: #{tpu_custom_call.1} parent=1 // pred_check
      _
    $region11: #{tpu_custom_call.1} parent=1 // pred_check_branch
      %42 = sbr.rel (0) target = $region13
    $region12: #{tpu_custom_call.1} parent=1 // pred_region
      _
    $region13: #{tpu_custom_call.1} parent=1 // pred_fallthru
      _
    // Predicated region
    $region14: #{tpu_custom_call.1} parent=1 // pred_check
      _
    $region15: #{tpu_custom_call.1} parent=1 // pred_check_branch
      %44 = sbr.rel (0) target = $region17
    $region16: #{tpu_custom_call.1} parent=1 // pred_region
      %46 = vsyncadd [#allocation6], 0
      %s47 = sshll.u32 %s3, 4
      %s48 = int_to_ptr.hbm [resolvable:$true] %s47
      %s49 = sshll.u32 [#allocation7], 4
      %s50 = int_to_ptr.vmem [resolvable:$true] %s49
      %55 = dma.hbm_to_vmem [thread:$0]  %s48, 1024, %s50, [#allocation6], 64, 64, 4
    $region17: #{tpu_custom_call.1} parent=1 // pred_fallthru
      _
    // Predicated region
    $region18: #{tpu_custom_call.1} parent=1 // pred_check
      _
    $region19: #{tpu_custom_call.1} parent=1 // pred_check_branch
      %57 = sbr.rel (0) target = $region21
    $region20: #{tpu_custom_call.1} parent=1 // pred_region
      _
    $region21: #{tpu_custom_call.1} parent=1 // pred_fallthru
      _
    // Predicated region
    $region22: #{tpu_custom_call.1} parent=1 // pred_check
      _
    $region23: #{tpu_custom_call.1} parent=1 // pred_check_branch
      %59 = sbr.rel (0) target = $region25
    $region24: #{tpu_custom_call.1} parent=1 // pred_region
      _
    $region25: #{tpu_custom_call.1} parent=1 // pred_fallthru
      _
    // Predicated region
    $region26: #{tpu_custom_call.1} parent=1 // pred_check
      _
    $region27: #{tpu_custom_call.1} parent=1 // pred_check_branch
      %61 = sbr.rel (0) target = $region29
    $region28: #{tpu_custom_call.1} parent=1 // pred_region
      _
    $region29: #{tpu_custom_call.1} parent=1 // pred_fallthru
      _
    // Predicated region
    $region30: #{tpu_custom_call.1} parent=1 // pred_check
      _
    $region31: #{tpu_custom_call.1} parent=1 // pred_check_branch
      %63 = sbr.rel (0) target = $region33
    $region32: #{tpu_custom_call.1} parent=1 // pred_region
      %65 = dma.done [#allocation3], 1024
    $region33: #{tpu_custom_call.1} parent=1 // pred_fallthru
      _
    // Predicated region
    $region34: #{tpu_custom_call.1} parent=1 // pred_check
      _
    $region35: #{tpu_custom_call.1} parent=1 // pred_check_branch
      %67 = sbr.rel (0) target = $region37
    $region36: #{tpu_custom_call.1} parent=1 // pred_region
      %69 = dma.done [#allocation6], 8192
    $region37: #{tpu_custom_call.1} parent=1 // pred_fallthru
      _
    // Predicated region
    $region38: #{tpu_custom_call.1} parent=1 // pred_check
      _
    $region39: #{tpu_custom_call.1} parent=1 // pred_check_branch
      %71 = sbr.rel (0) target = $region41
    $region40: #{tpu_custom_call.1} parent=1 // pred_region
      %73 = dma.done [#allocation6], 1024
    $region41: #{tpu_custom_call.1} parent=1 // pred_fallthru
      _
    %v74 = vld [vmem:[#allocation2] sm:$0xff]
    %v75 = vld [vmem:[#allocation2 + $0x8] sm:$0xff]
    %v76 = vld [vmem:[#allocation2 + $0x10] sm:$0xff]
    %v77 = vld [vmem:[#allocation2 + $0x18] sm:$0xff]
    %v78 = vld [vmem:[#allocation2 + $0x20] sm:$0xff]
    %v79 = vld [vmem:[#allocation2 + $0x28] sm:$0xff]
    %v80 = vld [vmem:[#allocation2 + $0x30] sm:$0xff]
    %v81 = vld [vmem:[#allocation2 + $0x38] sm:$0xff]
    %v82 = vld [vmem:[#allocation5] sm:$0xf]
    %v83 = vld [vmem:[#allocation5 + $0x4] sm:$0xf]
    %v84 = vld [vmem:[#allocation5 + $0x8] sm:$0xf]
    %v85 = vld [vmem:[#allocation5 + $0xc] sm:$0xf]
    %v86 = vld [vmem:[#allocation5 + $0x10] sm:$0xf]
    %v87 = vld [vmem:[#allocation5 + $0x14] sm:$0xf]
    %v88 = vld [vmem:[#allocation5 + $0x18] sm:$0xf]
    %v89 = vld [vmem:[#allocation5 + $0x1c] sm:$0xf]
    %v90 = vld [vmem:[#allocation5 + $0x20] sm:$0xf]
    %v91 = vld [vmem:[#allocation5 + $0x24] sm:$0xf]
    %v92 = vld [vmem:[#allocation5 + $0x28] sm:$0xf]
    %v93 = vld [vmem:[#allocation5 + $0x2c] sm:$0xf]
    %v94 = vld [vmem:[#allocation5 + $0x30] sm:$0xf]
    %v95 = vld [vmem:[#allocation5 + $0x34] sm:$0xf]
    %v96 = vld [vmem:[#allocation5 + $0x38] sm:$0xf]
    %v97 = vld [vmem:[#allocation5 + $0x3c] sm:$0xf]
    %v98 = vld [vmem:[#allocation5 + $0x40] sm:$0xf]
    %v99 = vld [vmem:[#allocation5 + $0x44] sm:$0xf]
    %v100 = vld [vmem:[#allocation5 + $0x48] sm:$0xf]
    %v101 = vld [vmem:[#allocation5 + $0x4c] sm:$0xf]
    %v102 = vld [vmem:[#allocation5 + $0x50] sm:$0xf]
    %v103 = vld [vmem:[#allocation5 + $0x54] sm:$0xf]
    %v104 = vld [vmem:[#allocation5 + $0x58] sm:$0xf]
    %v105 = vld [vmem:[#allocation5 + $0x5c] sm:$0xf]
    %v106 = vld [vmem:[#allocation5 + $0x60] sm:$0xf]
    %v107 = vld [vmem:[#allocation5 + $0x64] sm:$0xf]
    %v108 = vld [vmem:[#allocation5 + $0x68] sm:$0xf]
    %v109 = vld [vmem:[#allocation5 + $0x6c] sm:$0xf]
    %v110 = vld [vmem:[#allocation5 + $0x70] sm:$0xf]
    %v111 = vld [vmem:[#allocation5 + $0x74] sm:$0xf]
    %v112 = vld [vmem:[#allocation5 + $0x78] sm:$0xf]
    %v113 = vld [vmem:[#allocation5 + $0x7c] sm:$0xf]
    %v114 = vld [vmem:[#allocation5 + $0x80] sm:$0xf]
    %v115 = vld [vmem:[#allocation5 + $0x84] sm:$0xf]
    %v116 = vld [vmem:[#allocation5 + $0x88] sm:$0xf]
    %v117 = vld [vmem:[#allocation5 + $0x8c] sm:$0xf]
    %v118 = vld [vmem:[#allocation5 + $0x90] sm:$0xf]
    %v119 = vld [vmem:[#allocation5 + $0x94] sm:$0xf]
    %v120 = vld [vmem:[#allocation5 + $0x98] sm:$0xf]
    %v121 = vld [vmem:[#allocation5 + $0x9c] sm:$0xf]
    %v122 = vld [vmem:[#allocation5 + $0xa0] sm:$0xf]
    %v123 = vld [vmem:[#allocation5 + $0xa4] sm:$0xf]
    %v124 = vld [vmem:[#allocation5 + $0xa8] sm:$0xf]
    %v125 = vld [vmem:[#allocation5 + $0xac] sm:$0xf]
    %v126 = vld [vmem:[#allocation5 + $0xb0] sm:$0xf]
    %v127 = vld [vmem:[#allocation5 + $0xb4] sm:$0xf]
    %v128 = vld [vmem:[#allocation5 + $0xb8] sm:$0xf]
    %v129 = vld [vmem:[#allocation5 + $0xbc] sm:$0xf]
    %v130 = vld [vmem:[#allocation5 + $0xc0] sm:$0xf]
    %v131 = vld [vmem:[#allocation5 + $0xc4] sm:$0xf]
    %v132 = vld [vmem:[#allocation5 + $0xc8] sm:$0xf]
    %v133 = vld [vmem:[#allocation5 + $0xcc] sm:$0xf]
    %v134 = vld [vmem:[#allocation5 + $0xd0] sm:$0xf]
    %v135 = vld [vmem:[#allocation5 + $0xd4] sm:$0xf]
    %v136 = vld [vmem:[#allocation5 + $0xd8] sm:$0xf]
    %v137 = vld [vmem:[#allocation5 + $0xdc] sm:$0xf]
    %v138 = vld [vmem:[#allocation5 + $0xe0] sm:$0xf]
    %v139 = vld [vmem:[#allocation5 + $0xe4] sm:$0xf]
    %v140 = vld [vmem:[#allocation5 + $0xe8] sm:$0xf]
    %v141 = vld [vmem:[#allocation5 + $0xec] sm:$0xf]
    %v142 = vld [vmem:[#allocation5 + $0xf0] sm:$0xf]
    %v143 = vld [vmem:[#allocation5 + $0xf4] sm:$0xf]
    %v144 = vld [vmem:[#allocation5 + $0xf8] sm:$0xf]
    %v145 = vld [vmem:[#allocation5 + $0xfc] sm:$0xf]
    %v146 = vld [vmem:[#allocation5 + $0x100] sm:$0xf]
    %v147 = vld [vmem:[#allocation5 + $0x104] sm:$0xf]
    %v148 = vld [vmem:[#allocation5 + $0x108] sm:$0xf]
    %v149 = vld [vmem:[#allocation5 + $0x10c] sm:$0xf]
    %v150 = vld [vmem:[#allocation5 + $0x110] sm:$0xf]
    %v151 = vld [vmem:[#allocation5 + $0x114] sm:$0xf]
    %v152 = vld [vmem:[#allocation5 + $0x118] sm:$0xf]
    %v153 = vld [vmem:[#allocation5 + $0x11c] sm:$0xf]
    %v154 = vld [vmem:[#allocation5 + $0x120] sm:$0xf]
    %v155 = vld [vmem:[#allocation5 + $0x124] sm:$0xf]
    %v156 = vld [vmem:[#allocation5 + $0x128] sm:$0xf]
    %v157 = vld [vmem:[#allocation5 + $0x12c] sm:$0xf]
    %v158 = vld [vmem:[#allocation5 + $0x130] sm:$0xf]
    %v159 = vld [vmem:[#allocation5 + $0x134] sm:$0xf]
    %v160 = vld [vmem:[#allocation5 + $0x138] sm:$0xf]
    %v161 = vld [vmem:[#allocation5 + $0x13c] sm:$0xf]
    %v162 = vld [vmem:[#allocation5 + $0x140] sm:$0xf]
    %v163 = vld [vmem:[#allocation5 + $0x144] sm:$0xf]
    %v164 = vld [vmem:[#allocation5 + $0x148] sm:$0xf]
    %v165 = vld [vmem:[#allocation5 + $0x14c] sm:$0xf]
    %v166 = vld [vmem:[#allocation5 + $0x150] sm:$0xf]
    %v167 = vld [vmem:[#allocation5 + $0x154] sm:$0xf]
    %v168 = vld [vmem:[#allocation5 + $0x158] sm:$0xf]
    %v169 = vld [vmem:[#allocation5 + $0x15c] sm:$0xf]
    %v170 = vld [vmem:[#allocation5 + $0x160] sm:$0xf]
    %v171 = vld [vmem:[#allocation5 + $0x164] sm:$0xf]
    %v172 = vld [vmem:[#allocation5 + $0x168] sm:$0xf]
    %v173 = vld [vmem:[#allocation5 + $0x16c] sm:$0xf]
    %v174 = vld [vmem:[#allocation5 + $0x170] sm:$0xf]
    %v175 = vld [vmem:[#allocation5 + $0x174] sm:$0xf]
    %v176 = vld [vmem:[#allocation5 + $0x178] sm:$0xf]
    %v177 = vld [vmem:[#allocation5 + $0x17c] sm:$0xf]
    %v178 = vld [vmem:[#allocation5 + $0x180] sm:$0xf]
    %v179 = vld [vmem:[#allocation5 + $0x184] sm:$0xf]
    %v180 = vld [vmem:[#allocation5 + $0x188] sm:$0xf]
    %v181 = vld [vmem:[#allocation5 + $0x18c] sm:$0xf]
    %v182 = vld [vmem:[#allocation5 + $0x190] sm:$0xf]
    %v183 = vld [vmem:[#allocation5 + $0x194] sm:$0xf]
    %v184 = vld [vmem:[#allocation5 + $0x198] sm:$0xf]
    %v185 = vld [vmem:[#allocation5 + $0x19c] sm:$0xf]
    %v186 = vld [vmem:[#allocation5 + $0x1a0] sm:$0xf]
    %v187 = vld [vmem:[#allocation5 + $0x1a4] sm:$0xf]
    %v188 = vld [vmem:[#allocation5 + $0x1a8] sm:$0xf]
    %v189 = vld [vmem:[#allocation5 + $0x1ac] sm:$0xf]
    %v190 = vld [vmem:[#allocation5 + $0x1b0] sm:$0xf]
    %v191 = vld [vmem:[#allocation5 + $0x1b4] sm:$0xf]
    %v192 = vld [vmem:[#allocation5 + $0x1b8] sm:$0xf]
    %v193 = vld [vmem:[#allocation5 + $0x1bc] sm:$0xf]
    %v194 = vld [vmem:[#allocation5 + $0x1c0] sm:$0xf]
    %v195 = vld [vmem:[#allocation5 + $0x1c4] sm:$0xf]
    %v196 = vld [vmem:[#allocation5 + $0x1c8] sm:$0xf]
    %v197 = vld [vmem:[#allocation5 + $0x1cc] sm:$0xf]
    %v198 = vld [vmem:[#allocation5 + $0x1d0] sm:$0xf]
    %v199 = vld [vmem:[#allocation5 + $0x1d4] sm:$0xf]
    %v200 = vld [vmem:[#allocation5 + $0x1d8] sm:$0xf]
    %v201 = vld [vmem:[#allocation5 + $0x1dc] sm:$0xf]
    %v202 = vld [vmem:[#allocation5 + $0x1e0] sm:$0xf]
    %v203 = vld [vmem:[#allocation5 + $0x1e4] sm:$0xf]
    %v204 = vld [vmem:[#allocation5 + $0x1e8] sm:$0xf]
    %v205 = vld [vmem:[#allocation5 + $0x1ec] sm:$0xf]
    %v206 = vld [vmem:[#allocation5 + $0x1f0] sm:$0xf]
    %v207 = vld [vmem:[#allocation5 + $0x1f4] sm:$0xf]
    %v208 = vld [vmem:[#allocation5 + $0x1f8] sm:$0xf]
    %v209 = vld [vmem:[#allocation5 + $0x1fc] sm:$0xf]
    %v210 = vld [vmem:[%s2] sm:$0x1]
    %v212 = vperm.slane %v210, 0
    %v222 = vunpack.c.l.b16 %v74
    %v223 = vunpack.c.h.b16 %v74
    %v224 = vunpack.c.l.b16 %v75
    %v225 = vunpack.c.h.b16 %v75
    %v226 = vunpack.c.l.b16 %v76
    %v227 = vunpack.c.h.b16 %v76
    %v228 = vunpack.c.l.b16 %v77
    %v229 = vunpack.c.h.b16 %v77
    %v230 = vunpack.c.l.b16 %v78
    %v231 = vunpack.c.h.b16 %v78
    %v232 = vunpack.c.l.b16 %v79
    %v233 = vunpack.c.h.b16 %v79
    %v234 = vunpack.c.l.b16 %v80
    %v235 = vunpack.c.h.b16 %v80
    %v236 = vunpack.c.l.b16 %v81
    %v237 = vunpack.c.h.b16 %v81
    %v238 = vpack.c.b16 %v230, %v222
    %v239 = vpack.c.b16 %v231, %v223
    %v240 = vpack.c.b16 %v232, %v224
    %v241 = vpack.c.b16 %v233, %v225
    %v242 = vpack.c.b16 %v234, %v226
    %v243 = vpack.c.b16 %v235, %v227
    %v244 = vpack.c.b16 %v236, %v228
    %v245 = vpack.c.b16 %v237, %v229
    %v382 = vunpack.c.l.b16 %v82
    %v383 = vunpack.c.l.b16 %v83
    %v384 = vunpack.c.l.b16 %v84
    %v385 = vunpack.c.l.b16 %v85
    %v386 = vunpack.c.l.b16 %v86
    %v387 = vunpack.c.l.b16 %v87
    %v388 = vunpack.c.l.b16 %v88
    %v389 = vunpack.c.l.b16 %v89
    %v390 = vunpack.c.l.b16 %v90
    %v391 = vunpack.c.l.b16 %v91
    %v392 = vunpack.c.l.b16 %v92
    %v393 = vunpack.c.l.b16 %v93
    %v394 = vunpack.c.l.b16 %v94
    %v395 = vunpack.c.l.b16 %v95
    %v396 = vunpack.c.l.b16 %v96
    %v397 = vunpack.c.l.b16 %v97
    %v398 = vunpack.c.l.b16 %v98
    %v399 = vunpack.c.l.b16 %v99
    %v400 = vunpack.c.l.b16 %v100
    %v401 = vunpack.c.l.b16 %v101
    %v402 = vunpack.c.l.b16 %v102
    %v403 = vunpack.c.l.b16 %v103
    %v404 = vunpack.c.l.b16 %v104
    %v405 = vunpack.c.l.b16 %v105
    %v406 = vunpack.c.l.b16 %v106
    %v407 = vunpack.c.l.b16 %v107
    %v408 = vunpack.c.l.b16 %v108
    %v409 = vunpack.c.l.b16 %v109
    %v410 = vunpack.c.l.b16 %v110
    %v411 = vunpack.c.l.b16 %v111
    %v412 = vunpack.c.l.b16 %v112
    %v413 = vunpack.c.l.b16 %v113
    %v414 = vunpack.c.l.b16 %v114
    %v415 = vunpack.c.l.b16 %v115
    %v416 = vunpack.c.l.b16 %v116
    %v417 = vunpack.c.l.b16 %v117
    %v418 = vunpack.c.l.b16 %v118
    %v419 = vunpack.c.l.b16 %v119
    %v420 = vunpack.c.l.b16 %v120
    %v421 = vunpack.c.l.b16 %v121
    %v422 = vunpack.c.l.b16 %v122
    %v423 = vunpack.c.l.b16 %v123
    %v424 = vunpack.c.l.b16 %v124
    %v425 = vunpack.c.l.b16 %v125
    %v426 = vunpack.c.l.b16 %v126
    %v427 = vunpack.c.l.b16 %v127
    %v428 = vunpack.c.l.b16 %v128
    %v429 = vunpack.c.l.b16 %v129
    %v430 = vunpack.c.l.b16 %v130
    %v431 = vunpack.c.l.b16 %v131
    %v432 = vunpack.c.l.b16 %v132
    %v433 = vunpack.c.l.b16 %v133
    %v434 = vunpack.c.l.b16 %v134
    %v435 = vunpack.c.l.b16 %v135
    %v436 = vunpack.c.l.b16 %v136
    %v437 = vunpack.c.l.b16 %v137
    %v438 = vunpack.c.l.b16 %v138
    %v439 = vunpack.c.l.b16 %v139
    %v440 = vunpack.c.l.b16 %v140
    %v441 = vunpack.c.l.b16 %v141
    %v442 = vunpack.c.l.b16 %v142
    %v443 = vunpack.c.l.b16 %v143
    %v444 = vunpack.c.l.b16 %v144
    %v445 = vunpack.c.l.b16 %v145
    %v446 = vunpack.c.l.b16 %v146
    %v447 = vunpack.c.l.b16 %v147
    %v448 = vunpack.c.l.b16 %v148
    %v449 = vunpack.c.l.b16 %v149
    %v450 = vunpack.c.l.b16 %v150
    %v451 = vunpack.c.l.b16 %v151
    %v452 = vunpack.c.l.b16 %v152
    %v453 = vunpack.c.l.b16 %v153
    %v454 = vunpack.c.l.b16 %v154
    %v455 = vunpack.c.l.b16 %v155
    %v456 = vunpack.c.l.b16 %v156
    %v457 = vunpack.c.l.b16 %v157
    %v458 = vunpack.c.l.b16 %v158
    %v459 = vunpack.c.l.b16 %v159
    %v460 = vunpack.c.l.b16 %v160
    %v461 = vunpack.c.l.b16 %v161
    %v462 = vunpack.c.l.b16 %v162
    %v463 = vunpack.c.l.b16 %v163
    %v464 = vunpack.c.l.b16 %v164
    %v465 = vunpack.c.l.b16 %v165
    %v466 = vunpack.c.l.b16 %v166
    %v467 = vunpack.c.l.b16 %v167
    %v468 = vunpack.c.l.b16 %v168
    %v469 = vunpack.c.l.b16 %v169
    %v470 = vunpack.c.l.b16 %v170
    %v471 = vunpack.c.l.b16 %v171
    %v472 = vunpack.c.l.b16 %v172
    %v473 = vunpack.c.l.b16 %v173
    %v474 = vunpack.c.l.b16 %v174
    %v475 = vunpack.c.l.b16 %v175
    %v476 = vunpack.c.l.b16 %v176
    %v477 = vunpack.c.l.b16 %v177
    %v478 = vunpack.c.l.b16 %v178
    %v479 = vunpack.c.l.b16 %v179
    %v480 = vunpack.c.l.b16 %v180
    %v481 = vunpack.c.l.b16 %v181
    %v482 = vunpack.c.l.b16 %v182
    %v483 = vunpack.c.l.b16 %v183
    %v484 = vunpack.c.l.b16 %v184
    %v485 = vunpack.c.l.b16 %v185
    %v486 = vunpack.c.l.b16 %v186
    %v487 = vunpack.c.l.b16 %v187
    %v488 = vunpack.c.l.b16 %v188
    %v489 = vunpack.c.l.b16 %v189
    %v490 = vunpack.c.l.b16 %v190
    %v491 = vunpack.c.l.b16 %v191
    %v492 = vunpack.c.l.b16 %v192
    %v493 = vunpack.c.l.b16 %v193
    %v494 = vunpack.c.l.b16 %v194
    %v495 = vunpack.c.l.b16 %v195
    %v496 = vunpack.c.l.b16 %v196
    %v497 = vunpack.c.l.b16 %v197
    %v498 = vunpack.c.l.b16 %v198
    %v499 = vunpack.c.l.b16 %v199
    %v500 = vunpack.c.l.b16 %v200
    %v501 = vunpack.c.l.b16 %v201
    %v502 = vunpack.c.l.b16 %v202
    %v503 = vunpack.c.l.b16 %v203
    %v504 = vunpack.c.l.b16 %v204
    %v505 = vunpack.c.l.b16 %v205
    %v506 = vunpack.c.l.b16 %v206
    %v507 = vunpack.c.l.b16 %v207
    %v508 = vunpack.c.l.b16 %v208
    %v509 = vunpack.c.l.b16 %v209
    %v510 = vpack.c.b16 %v383, %v382
    %v511 = vpack.c.b16 %v385, %v384
    %v512 = vpack.c.b16 %v387, %v386
    %v513 = vpack.c.b16 %v389, %v388
    %v514 = vpack.c.b16 %v391, %v390
    %v515 = vpack.c.b16 %v393, %v392
    %v516 = vpack.c.b16 %v395, %v394
    %v517 = vpack.c.b16 %v397, %v396
    %v518 = vpack.c.b16 %v399, %v398
    %v519 = vpack.c.b16 %v401, %v400
    %v520 = vpack.c.b16 %v403, %v402
    %v521 = vpack.c.b16 %v405, %v404
    %v522 = vpack.c.b16 %v407, %v406
    %v523 = vpack.c.b16 %v409, %v408
    %v524 = vpack.c.b16 %v411, %v410
    %v525 = vpack.c.b16 %v413, %v412
    %v526 = vpack.c.b16 %v415, %v414
    %v527 = vpack.c.b16 %v417, %v416
    %v528 = vpack.c.b16 %v419, %v418
    %v529 = vpack.c.b16 %v421, %v420
    %v530 = vpack.c.b16 %v423, %v422
    %v531 = vpack.c.b16 %v425, %v424
    %v532 = vpack.c.b16 %v427, %v426
    %v533 = vpack.c.b16 %v429, %v428
    %v534 = vpack.c.b16 %v431, %v430
    %v535 = vpack.c.b16 %v433, %v432
    %v536 = vpack.c.b16 %v435, %v434
    %v537 = vpack.c.b16 %v437, %v436
    %v538 = vpack.c.b16 %v439, %v438
    %v539 = vpack.c.b16 %v441, %v440
    %v540 = vpack.c.b16 %v443, %v442
    %v541 = vpack.c.b16 %v445, %v444
    %v542 = vpack.c.b16 %v447, %v446
    %v543 = vpack.c.b16 %v449, %v448
    %v544 = vpack.c.b16 %v451, %v450
    %v545 = vpack.c.b16 %v453, %v452
    %v546 = vpack.c.b16 %v455, %v454
    %v547 = vpack.c.b16 %v457, %v456
    %v548 = vpack.c.b16 %v459, %v458
    %v549 = vpack.c.b16 %v461, %v460
    %v550 = vpack.c.b16 %v463, %v462
    %v551 = vpack.c.b16 %v465, %v464
    %v552 = vpack.c.b16 %v467, %v466
    %v553 = vpack.c.b16 %v469, %v468
    %v554 = vpack.c.b16 %v471, %v470
    %v555 = vpack.c.b16 %v473, %v472
    %v556 = vpack.c.b16 %v475, %v474
    %v557 = vpack.c.b16 %v477, %v476
    %v558 = vpack.c.b16 %v479, %v478
    %v559 = vpack.c.b16 %v481, %v480
    %v560 = vpack.c.b16 %v483, %v482
    %v561 = vpack.c.b16 %v485, %v484
    %v562 = vpack.c.b16 %v487, %v486
    %v563 = vpack.c.b16 %v489, %v488
    %v564 = vpack.c.b16 %v491, %v490
    %v565 = vpack.c.b16 %v493, %v492
    %v566 = vpack.c.b16 %v495, %v494
    %v567 = vpack.c.b16 %v497, %v496
    %v568 = vpack.c.b16 %v499, %v498
    %v569 = vpack.c.b16 %v501, %v500
    %v570 = vpack.c.b16 %v503, %v502
    %v571 = vpack.c.b16 %v505, %v504
    %v572 = vpack.c.b16 %v507, %v506
    %v573 = vpack.c.b16 %v509, %v508
    %638 = vmatpush.bf16.msra.mxu0 %v517
    %639 = vmatpush.bf16.msra.mxu0 %v516
    %640 = vmatpush.bf16.msra.mxu0 %v515
    %641 = vmatpush.bf16.msra.mxu0 %v514
    %642 = vmatpush.bf16.msra.mxu0 %v513
    %643 = vmatpush.bf16.msra.mxu0 %v512
    %644 = vmatpush.bf16.msra.mxu0 %v511
    %645 = vmatpush.bf16.msra.mxu0 %v510
    %646 = vmatmul.bf16.gmra.mxu0 %v238
    %v647 = vpop.f32.mrf.mxu0
    %v648 = vadd.f32 %v212, %v647
    %v649 = vpop.f32.mrf.mxu0
    %v650 = vadd.f32 %v212, %v649
    %651 = vdwg.mxu0
    %652 = vmatpush.bf16.msra.mxu0 %v525
    %653 = vmatpush.bf16.msra.mxu0 %v524
    %654 = vmatpush.bf16.msra.mxu0 %v523
    %655 = vmatpush.bf16.msra.mxu0 %v522
    %656 = vmatpush.bf16.msra.mxu0 %v521
    %657 = vmatpush.bf16.msra.mxu0 %v520
    %658 = vmatpush.bf16.msra.mxu0 %v519
    %659 = vmatpush.bf16.msra.mxu0 %v518
    %660 = vmatmul.bf16.gmra.mxu0 %v239
    %v661 = vpop.f32.mrf.mxu0
    %v662 = vadd.f32 %v648, %v661
    %v663 = vpop.f32.mrf.mxu0
    %v664 = vadd.f32 %v650, %v663
    %665 = vdwg.mxu0
    %666 = vmatpush.bf16.msra.mxu0 %v533
    %667 = vmatpush.bf16.msra.mxu0 %v532
    %668 = vmatpush.bf16.msra.mxu0 %v531
    %669 = vmatpush.bf16.msra.mxu0 %v530
    %670 = vmatpush.bf16.msra.mxu0 %v529
    %671 = vmatpush.bf16.msra.mxu0 %v528
    %672 = vmatpush.bf16.msra.mxu0 %v527
    %673 = vmatpush.bf16.msra.mxu0 %v526
    %674 = vmatmul.bf16.gmra.mxu0 %v240
    %v675 = vpop.f32.mrf.mxu0
    %v676 = vadd.f32 %v662, %v675
    %v677 = vpop.f32.mrf.mxu0
    %v678 = vadd.f32 %v664, %v677
    %679 = vdwg.mxu0
    %680 = vmatpush.bf16.msra.mxu0 %v541
    %681 = vmatpush.bf16.msra.mxu0 %v540
    %682 = vmatpush.bf16.msra.mxu0 %v539
    %683 = vmatpush.bf16.msra.mxu0 %v538
    %684 = vmatpush.bf16.msra.mxu0 %v537
    %685 = vmatpush.bf16.msra.mxu0 %v536
    %686 = vmatpush.bf16.msra.mxu0 %v535
    %687 = vmatpush.bf16.msra.mxu0 %v534
    %688 = vmatmul.bf16.gmra.mxu0 %v241
    %v689 = vpop.f32.mrf.mxu0
    %v690 = vadd.f32 %v676, %v689
    %v691 = vpop.f32.mrf.mxu0
    %v692 = vadd.f32 %v678, %v691
    %693 = vdwg.mxu0
    %694 = vmatpush.bf16.msra.mxu0 %v549
    %695 = vmatpush.bf16.msra.mxu0 %v548
    %696 = vmatpush.bf16.msra.mxu0 %v547
    %697 = vmatpush.bf16.msra.mxu0 %v546
    %698 = vmatpush.bf16.msra.mxu0 %v545
    %699 = vmatpush.bf16.msra.mxu0 %v544
    %700 = vmatpush.bf16.msra.mxu0 %v543
    %701 = vmatpush.bf16.msra.mxu0 %v542
    %702 = vmatmul.bf16.gmra.mxu0 %v242
    %v703 = vpop.f32.mrf.mxu0
    %v704 = vadd.f32 %v690, %v703
    %v705 = vpop.f32.mrf.mxu0
    %v706 = vadd.f32 %v692, %v705
    %707 = vdwg.mxu0
    %708 = vmatpush.bf16.msra.mxu0 %v557
    %709 = vmatpush.bf16.msra.mxu0 %v556
    %710 = vmatpush.bf16.msra.mxu0 %v555
    %711 = vmatpush.bf16.msra.mxu0 %v554
    %712 = vmatpush.bf16.msra.mxu0 %v553
    %713 = vmatpush.bf16.msra.mxu0 %v552
    %714 = vmatpush.bf16.msra.mxu0 %v551
    %715 = vmatpush.bf16.msra.mxu0 %v550
    %716 = vmatmul.bf16.gmra.mxu0 %v243
    %v717 = vpop.f32.mrf.mxu0
    %v718 = vadd.f32 %v704, %v717
    %v719 = vpop.f32.mrf.mxu0
    %v720 = vadd.f32 %v706, %v719
    %721 = vdwg.mxu0
    %722 = vmatpush.bf16.msra.mxu0 %v565
    %723 = vmatpush.bf16.msra.mxu0 %v564
    %724 = vmatpush.bf16.msra.mxu0 %v563
    %725 = vmatpush.bf16.msra.mxu0 %v562
    %726 = vmatpush.bf16.msra.mxu0 %v561
    %727 = vmatpush.bf16.msra.mxu0 %v560
    %728 = vmatpush.bf16.msra.mxu0 %v559
    %729 = vmatpush.bf16.msra.mxu0 %v558
    %730 = vmatmul.bf16.gmra.mxu0 %v244
    %v731 = vpop.f32.mrf.mxu0
    %v732 = vadd.f32 %v718, %v731
    %v733 = vpop.f32.mrf.mxu0
    %v734 = vadd.f32 %v720, %v733
    %735 = vdwg.mxu0
    %736 = vmatpush.bf16.msra.mxu0 %v573
    %737 = vmatpush.bf16.msra.mxu0 %v572
    %738 = vmatpush.bf16.msra.mxu0 %v571
    %739 = vmatpush.bf16.msra.mxu0 %v570
    %740 = vmatpush.bf16.msra.mxu0 %v569
    %741 = vmatpush.bf16.msra.mxu0 %v568
    %742 = vmatpush.bf16.msra.mxu0 %v567
    %743 = vmatpush.bf16.msra.mxu0 %v566
    %744 = vmatmul.bf16.gmra.mxu0 %v245
    %v745 = vpop.f32.mrf.mxu0
    %v746 = vadd.f32 %v732, %v745
    %v747 = vpop.f32.mrf.mxu0
    %v748 = vadd.f32 %v734, %v747
    %749 = vdwg.mxu0
    %v750 = vmax.f32 %v746, 0.0
    %v751 = vmax.f32 %v748, 0.0
    %v752 = vpack.c.bf16 %v751, %v750
    %v753 = vld [vmem:[#allocation7] sm:$0xf]
    %v754 = vld [vmem:[#allocation7 + $0x4] sm:$0xf]
    %v755 = vld [vmem:[#allocation7 + $0x8] sm:$0xf]
    %v756 = vld [vmem:[#allocation7 + $0xc] sm:$0xf]
    %v757 = vld [vmem:[#allocation7 + $0x10] sm:$0xf]
    %v758 = vld [vmem:[#allocation7 + $0x14] sm:$0xf]
    %v759 = vld [vmem:[#allocation7 + $0x18] sm:$0xf]
    %v760 = vld [vmem:[#allocation7 + $0x1c] sm:$0xf]
    %v761 = vld [vmem:[#allocation7 + $0x20] sm:$0xf]
    %v762 = vld [vmem:[#allocation7 + $0x24] sm:$0xf]
    %v763 = vld [vmem:[#allocation7 + $0x28] sm:$0xf]
    %v764 = vld [vmem:[#allocation7 + $0x2c] sm:$0xf]
    %v765 = vld [vmem:[#allocation7 + $0x30] sm:$0xf]
    %v766 = vld [vmem:[#allocation7 + $0x34] sm:$0xf]
    %v767 = vld [vmem:[#allocation7 + $0x38] sm:$0xf]
    %v768 = vld [vmem:[#allocation7 + $0x3c] sm:$0xf]
    %v769 = vld [vmem:[%s4] sm:$0x1]
    %v771 = vperm.slane %v769, 0
    %v789 = vunpack.c.l.b16 %v753
    %v790 = vunpack.c.l.b16 %v754
    %v791 = vunpack.c.l.b16 %v755
    %v792 = vunpack.c.l.b16 %v756
    %v793 = vunpack.c.l.b16 %v757
    %v794 = vunpack.c.l.b16 %v758
    %v795 = vunpack.c.l.b16 %v759
    %v796 = vunpack.c.l.b16 %v760
    %v797 = vunpack.c.l.b16 %v761
    %v798 = vunpack.c.l.b16 %v762
    %v799 = vunpack.c.l.b16 %v763
    %v800 = vunpack.c.l.b16 %v764
    %v801 = vunpack.c.l.b16 %v765
    %v802 = vunpack.c.l.b16 %v766
    %v803 = vunpack.c.l.b16 %v767
    %v804 = vunpack.c.l.b16 %v768
    %v805 = vpack.c.b16 %v790, %v789
    %v806 = vpack.c.b16 %v792, %v791
    %v807 = vpack.c.b16 %v794, %v793
    %v808 = vpack.c.b16 %v796, %v795
    %v809 = vpack.c.b16 %v798, %v797
    %v810 = vpack.c.b16 %v800, %v799
    %v811 = vpack.c.b16 %v802, %v801
    %v812 = vpack.c.b16 %v804, %v803
    %821 = vmatpush.bf16.msra.mxu0 %v812
    %822 = vmatpush.bf16.msra.mxu0 %v811
    %823 = vmatpush.bf16.msra.mxu0 %v810
    %824 = vmatpush.bf16.msra.mxu0 %v809
    %825 = vmatpush.bf16.msra.mxu0 %v808
    %826 = vmatpush.bf16.msra.mxu0 %v807
    %827 = vmatpush.bf16.msra.mxu0 %v806
    %828 = vmatpush.bf16.msra.mxu0 %v805
    %829 = vmatmul.bf16.gmra.mxu0 %v752
    %v830 = vpop.f32.mrf.mxu0
    %v831 = vadd.f32 %v771, %v830
    %v832 = vpop.f32.mrf.mxu0
    %v833 = vadd.f32 %v771, %v832
    %834 = vdwg.mxu0
    %v835 = vmul.f32 %v831, %v831
    %v836 = vmul.f32 %v833, %v833
    %839 = vrot.lane.b32.xlu0 %v835, 32
    %v840 = vpop.permute.xlu0 %839
    %841 = vrot.lane.b32.xlu0 %v836, 32
    %v842 = vpop.permute.xlu0 %841
    %vm845 = vcmask 261120
    %v846 = vsel %vm845, %v840, 0.0
    %847 = vadd.xlane.f32.xlu0 %v846
    %v848 = vpop.xlane.xlu0 %847
    %v849 = vsel %vm845, %v842, 0.0
    %850 = vadd.xlane.f32.xlu0 %v849
    %v851 = vpop.xlane.xlu0 %850
    %v852 = vmul.f32 %v848, 0.5
    %v853 = vmul.f32 %v851, 0.5
    %v854 = vld [vmem:[%s5] sm:$0x1]
    %v856 = vperm.slane %v854, 0
    %v858 = vmul.f32 %v852, %v856
    %v859 = vmul.f32 %v853, %v856
    %862 = vrot.lane.b32.xlu0 %v858, 33
    %v863 = vpop.permute.xlu0 %862
    %864 = vrot.lane.b32.xlu0 %v859, 33
    %v865 = vpop.permute.xlu0 %864
    %v868 = vsub.f32 %v831, %v863
    %v869 = vsub.f32 %v833, %v865
    %v870 = vmin.f32 %v868, 0.0
    %v871 = vmin.f32 %v869, 0.0
    %v872 = vld [vmem:[%s6] sm:$0x1]
    %v874 = vperm.slane %v872, 0
    %875 = vrot.lane.b32.xlu0 %v874, 33
    %v876 = vpop.permute.xlu0 %875
    %v878 = vadd.f32 %v870, %v876
    %v879 = vadd.f32 %v871, %v876
    %vm880 = vcmask 335112
    %v881 = vsel %vm880, %v878, -inf
    %882 = vmax.xlane.f32.xlu0 %v881
    %v883 = vpop.xlane.xlu0 %882
    %v884 = vsel %vm880, %v879, -inf
    %885 = vmax.xlane.f32.xlu0 %v884
    %v886 = vpop.xlane.xlu0 %885
    %v887 = vsub.f32 %v878, %v883
    %v888 = vsub.f32 %v879, %v886
    %v889 = vmul.f32 %v887, 1.442695
    %v890 = vpow.pop %v889
    %v891 = vmul.f32 %v888, 1.442695
    %v892 = vpow.pop %v891
    %895 = vrot.lane.b32.xlu0 %v890, 95
    %v896 = vpop.permute.xlu0 %895
    %897 = vrot.lane.b32.xlu0 %v892, 95
    %v898 = vpop.permute.xlu0 %897
    %vm901 = vcmask 64512
    %v902 = vsel %vm901, %v896, 0.0
    %903 = vadd.xlane.f32.xlu0 %v902
    %v904 = vpop.xlane.xlu0 %903
    %v905 = vsel %vm901, %v898, 0.0
    %906 = vadd.xlane.f32.xlu0 %v905
    %v907 = vpop.xlane.xlu0 %906
    %v908 = vlog2.pop %v904
    %v909 = vmul.f32 %v908, 0.6931472
    %v910 = vlog2.pop %v907
    %v911 = vmul.f32 %v910, 0.6931472
    %v912 = vadd.f32 %v883, %v909
    %v913 = vadd.f32 %v886, %v911
    %v914 = vlaneseq
    %v915 = vand.u32 %v914, 127
    %v916 = vmax.f32 %v831, 0.0
    %v917 = vmax.f32 %v833, 0.0
    %vm918 = vcmp.lt.s32.totalorder %v915, 32
    %vm919 = vcmp.eq.s32.totalorder %v915, 32
    %vm920 = vcmp.eq.s32.totalorder %v915, 33
    %v921 = vsel %vm920, %v912, 0.0
    %v922 = vsel %vm920, %v913, 0.0
    %v923 = vsel %vm919, %v831, %v921
    %v924 = vsel %vm919, %v833, %v922
    %v925 = vsel %vm918, %v916, %v923
    %v926 = vsel %vm918, %v917, %v924
    %927 = vst [vmem:[#allocation8] sm:$0xff] %v925
    %928 = vst [vmem:[#allocation8 + $0x8] sm:$0xff] %v926
    // Predicated region
    $region42: #{tpu_custom_call.1} parent=1 // pred_check
      _
    $region43: #{tpu_custom_call.1} parent=1 // pred_check_branch
      %930 = sbr.rel (0) target = $region45
    $region44: #{tpu_custom_call.1} parent=1 // pred_region
      %932 = vsyncadd [#allocation4], 0
      %s933 = sshll.u32 [#allocation8], 4
      %s934 = int_to_ptr.vmem [resolvable:$true] %s933
      %s935 = sshll.u32 %s7, 4
      %s936 = int_to_ptr.hbm [resolvable:$true] %s935
      %941 = dma.vmem_to_hbm [thread:$0]  %s934, 256, %s936, [#allocation4], 128, 128, 8
    $region45: #{tpu_custom_call.1} parent=1 // pred_fallthru
      _
    // Predicated region
    $region46: #{tpu_custom_call.1} parent=1 // pred_check
      _
    $region47: #{tpu_custom_call.1} parent=1 // pred_check_branch
      %943 = sbr.rel (0) target = $region49
    $region48: #{tpu_custom_call.1} parent=1 // pred_region
      %945 = dma.done [#allocation4], 256
    $region49: #{tpu_custom_call.1} parent=1 // pred_fallthru
      _
    %946 = vsyncpa [#allocation3], 1
    %947 = vsyncpa [#allocation6], 1
    %948 = vsyncpa [#allocation4], 1

</llo_original>
